<compile_context>
chip_gen: v6e
topology: v6e:2x2x1
jax: 0.10.0
libtpu: 0.0.40
codegen_flags: <defaults>
</compile_context>

<pallas_src>
import functools

import jax
import jax.numpy as jnp
from jax.experimental import pallas as pl
from jax.experimental.pallas import tpu as pltpu


# ----------------------------------------------------------------------------
# helpers
# ----------------------------------------------------------------------------
def _round_up(x, m):
    return (x + m - 1) // m * m


def _default_vmem_limit():
    """Generation-aware scoped-VMEM budget (~75% of physical VMEM)."""
    try:
        cap = pltpu.get_tpu_info().vmem_capacity_bytes
    except Exception:
        cap = 64 * 1024 * 1024          # conservative (v7x-sized) fallback
    return int(cap * 3 // 4)


def _pick_col_tile(o_pad, *, cap_bytes, per_col_bytes):
    """Largest multiple-of-128 divisor of o_pad whose streamed VMEM footprint
    fits under cap_bytes.  o_pad is a multiple of 128, so 128 is always a
    valid floor (no silent fallback to the full dimension)."""
    cap_cols = max(128, (int(cap_bytes) // max(int(per_col_bytes), 1)) // 128 * 128)
    d = o_pad // 128
    for m in range(min(d, cap_cols // 128), 0, -1):
        if d % m == 0:
            return m * 128
    return 128


def _row_tile(pre_seq_len):
    tr = min(512, _round_up(pre_seq_len, 16))      # >=16 for bf16 sublane packing
    r_pad = _round_up(pre_seq_len, tr)
    return tr, r_pad


# ----------------------------------------------------------------------------
# Kernel 1: fused Linear -> Tanh -> Linear over the (small) embedding table
# ----------------------------------------------------------------------------
def _mlp_kernel(emb_ref, w1_ref, b1_ref, w2_ref, b2_ref, o_ref, h_ref):
    # h computed once per row tile (first output-column step), stored in the
    # bf16 scratch (single cast) and reused for every column tile.
    @pl.when(pl.program_id(2) == 0)
    def _():
        h = jnp.dot(emb_ref[...], w1_ref[...],
                    preferred_element_type=jnp.float32) + b1_ref[...]
        h_ref[...] = jnp.tanh(h).astype(h_ref.dtype)

    out = jnp.dot(h_ref[...], w2_ref[...],
                  preferred_element_type=jnp.float32) + b2_ref[...]
    o_ref[...] = out.astype(o_ref.dtype)


def _mlp_table(emb, w1, b1, w2, b2, *, out_dtype, vmem_limit):
    """table = tanh(emb @ W1 + b1) @ W2 + b2, shape (r_pad, o_pad)."""
    r_pad, hidden = emb.shape
    p = w1.shape[1]
    o_pad = w2.shape[1]
    tr = min(512, r_pad)                    # prepare_params guarantees tr | r_pad

    wb = jnp.dtype(w2.dtype).itemsize
    hb = wb                                 # h scratch stored in the weight dtype
    ob = jnp.dtype(out_dtype).itemsize

    # --- VMEM budget -> column tile ------------------------------------------
    # Single-buffer W1 only when double-buffering it alone would eat more than
    # half the budget (large hidden*prefix_hidden on v7x).  Gated so small
    # configs never touch the pipeline_mode API.
    w1_bytes = hidden * p * jnp.dtype(w1.dtype).itemsize
    single_buffer_w1 = 2 * w1_bytes > vmem_limit // 2
    w1_spec = pl.BlockSpec((hidden, p), lambda s, i, j: (0, 0))
    if single_buffer_w1:
        try:
            w1_spec = pl.BlockSpec((hidden, p), lambda s, i, j: (0, 0),
                                   pipeline_mode=pl.Buffered(1))
        except Exception:                   # pipeline_mode unavailable -> keep default
            single_buffer_w1 = False
    w1_bufs = 1 if single_buffer_w1 else 2
    # TODO(synk): if even single-buffered W1 exceeds VMEM (very large hidden and
    # prefix_hidden on v7x), W1's p dimension would need its own grid axis.

    fixed = (2 * tr * hidden * jnp.dtype(emb.dtype).itemsize  # emb tile, dbl-buffered
             + w1_bufs * w1_bytes                             # W1
             + 2 * p * 4                                      # b1, dbl-buffered
             + tr * p * hb)                                   # h scratch
    per_col = (2 * p * wb                                     # W2 column, dbl-buffered
               + 2 * 4                                        # b2 column
               + 2 * tr * ob)                                 # out column, dbl-buffered
    tn = _pick_col_tile(o_pad, cap_bytes=max(vmem_limit - fixed, 128 * per_col),
                        per_col_bytes=per_col)

    o_tiles = o_pad // tn
    n_split = 2 if (o_tiles % 2 == 0 and o_tiles >= 2) else 1   # v7x dual-TC split
    jpc = o_tiles // n_split
    grid = (n_split, r_pad // tr, jpc)

    return pl.pallas_call(
        _mlp_kernel,
        out_shape=jax.ShapeDtypeStruct((r_pad, o_pad), out_dtype),
        grid_spec=pltpu.PrefetchScalarGridSpec(
            num_scalar_prefetch=0,
            grid=grid,
            in_specs=[
                pl.BlockSpec((tr, hidden), lambda s, i, j: (i, 0)),        # emb rows
                w1_spec,                                                   # W1 (invariant)
                pl.BlockSpec((1, p), lambda s, i, j: (0, 0)),              # b1 (invariant)
                pl.BlockSpec((p, tn), lambda s, i, j: (0, s * jpc + j)),   # W2 col tile
                pl.BlockSpec((1, tn), lambda s, i, j: (0, s * jpc + j)),   # b2 col tile
            ],
            out_specs=pl.BlockSpec((tr, tn), lambda s, i, j: (i, s * jpc + j)),
            scratch_shapes=[pltpu.VMEM((tr, p), w2.dtype)],                # h
        ),
        compiler_params=pltpu.CompilerParams(
            dimension_semantics=("parallel", "parallel", "arbitrary"),
            vmem_limit_bytes=vmem_limit),
    )(emb, w1, b1, w2, b2)


# ----------------------------------------------------------------------------
# Kernel 2: HBM -> HBM row gather by prefix id (pure DMA, no VMEM staging)
# ----------------------------------------------------------------------------
def _gather_dma_kernel(nbuf, idx_ref, table_ref, out_ref, sems):
    """out[i, :] = table[idx[i], :] with `nbuf` row DMAs kept in flight."""
    n = out_ref.shape[0]

    def start(i, slot):
        pltpu.make_async_copy(table_ref.at[pl.ds(idx_ref[i], 1)],
                              out_ref.at[pl.ds(i, 1)],
                              sems.at[slot]).start()

    for k in range(min(nbuf, n)):           # static prime of the ring
        start(k, k)

    @pl.loop(0, n)
    def _(i):
        slot = i % nbuf
        # Wait descriptor only needs the copy shape; row 0 refs give the byte count.
        pltpu.make_async_copy(table_ref.at[pl.ds(0, 1)],
                              out_ref.at[pl.ds(0, 1)],
                              sems.at[slot]).wait()

        @pl.when(i + nbuf < n)
        def _():
            start(i + nbuf, slot)


def _gather_rows_dma(idx, table, *, nbuf=8):
    n = idx.shape[0]
    d = table.shape[1]
    nbuf = max(1, min(nbuf, n))
    return pl.pallas_call(
        functools.partial(_gather_dma_kernel, nbuf),
        out_shape=jax.ShapeDtypeStruct((n, d), table.dtype),
        grid_spec=pltpu.PrefetchScalarGridSpec(
            num_scalar_prefetch=1,                       # idx lives in SMEM
            grid=(1,),
            in_specs=[pl.BlockSpec(memory_space=pl.ANY)],    # table stays in HBM
            out_specs=pl.BlockSpec(memory_space=pl.ANY),     # out written via DMA
            scratch_shapes=[pltpu.SemaphoreType.DMA((nbuf,))],
        ),
    )(idx, table)


# ----------------------------------------------------------------------------
# Parameter preparation (once, at load time) and public forward
# ----------------------------------------------------------------------------
def init_params(key, *, pre_seq_len, hidden_size, prefix_hidden_size,
                num_hidden_layers, prefix_projection):
    """f32 parameters mirroring nn.Embedding / nn.Linear shapes."""
    out_dim = num_hidden_layers * 2 * hidden_size
    ks = jax.random.split(key, 5)
    if prefix_projection:
        return {
            "embedding": jax.random.normal(ks[0], (pre_seq_len, hidden_size),
                                           jnp.float32),
            "w1": jax.random.normal(ks[1], (hidden_size, prefix_hidden_size),
                                    jnp.float32) * (1.0 / hidden_size ** 0.5),
            "b1": jax.random.normal(ks[2], (1, prefix_hidden_size),
                                    jnp.float32) * 0.01,
            "w2": jax.random.normal(ks[3], (prefix_hidden_size, out_dim),
                                    jnp.float32) * (1.0 / prefix_hidden_size ** 0.5),
            "b2": jax.random.normal(ks[4], (1, out_dim), jnp.float32) * 0.01,
        }
    return {
        "embedding": jax.random.normal(ks[0], (pre_seq_len, out_dim), jnp.float32),
    }


def prepare_params(raw, *, prefix_projection, weight_dtype=jnp.bfloat16,
                   table_dtype=None):
    """One-time conversion/padding of parameters to the kernel layout.

    weight_dtype=bf16 halves the dominant W2 HBM stream (intentional precision
    trade-off, see reference tolerance); use jnp.float32 for exact parity.
    table_dtype (no-projection path) can be bf16 to halve the memory-bound
    table read + output writeback; padded rows/cols are never read/returned.
    """
    if prefix_projection:
        emb = raw["embedding"]
        pre = emb.shape[0]
        _, r_pad = _row_tile(pre)
        emb = jnp.pad(emb, ((0, r_pad - pre), (0, 0))).astype(weight_dtype)
        w2 = raw["w2"]
        out_dim = w2.shape[1]
        o_pad = _round_up(out_dim, 128)
        w2 = jnp.pad(w2, ((0, 0), (0, o_pad - out_dim))).astype(weight_dtype)
        b2 = jnp.pad(raw["b2"], ((0, 0), (0, o_pad - out_dim))).astype(jnp.float32)
        return {
            "embedding": emb,
            "w1": raw["w1"].astype(weight_dtype),
            "b1": raw["b1"].astype(jnp.float32),
            "w2": w2,
            "b2": b2,
            "pre_seq_len": pre,
            "out_dim": out_dim,
        }
    emb = raw["embedding"]
    if table_dtype is not None:
        emb = emb.astype(table_dtype)
    return {"embedding": emb, "pre_seq_len": emb.shape[0], "out_dim": emb.shape[1]}


def prefix_encoder_forward(prefix, params, *, prefix_projection,
                           out_dtype=jnp.float32, vmem_limit_bytes=None):
    """prefix: (batch, prefix_len) int -> (batch, prefix_len, 2*layers*hidden).

    out_dtype=bf16 halves the output writeback when downstream past_key_values
    are bf16.  `params` must come from prepare_params (weights pre-cast/padded
    once at load time -- never per call).
    """
    B, S = prefix.shape
    idx = prefix.reshape(-1).astype(jnp.int32)
    O = params["out_dim"]

    if prefix_projection:
        if vmem_limit_bytes is None:
            vmem_limit_bytes = _default_vmem_limit()
        # Project the whole (tiny) embedding table once: W2 read exactly once,
        # independent of batch * prefix_len.
        table = _mlp_table(params["embedding"], params["w1"], params["b1"],
                           params["w2"], params["b2"],
                           out_dtype=out_dtype, vmem_limit=vmem_limit_bytes)
    else:
        # Pure memory-bound path: output dtype follows the stored table dtype.
        table = params["embedding"]

    out = _gather_rows_dma(idx, table)
    if out.shape[1] != O:                  # drop column padding (no-op if O % 128 == 0)
        out = out[:, :O]
    return out.reshape(B, S, O)


# ----------------------------------------------------------------------------
# Pure-JAX reference (f32 math on the prepared parameters)
# ----------------------------------------------------------------------------
def reference_forward(prefix, params, *, prefix_projection):
    O = params["out_dim"]
    x = jnp.take(params["embedding"].astype(jnp.float32), prefix, axis=0)
    if prefix_projection:
        x = jnp.tanh(x @ params["w1"].astype(jnp.float32) + params["b1"][0])
        x = x @ params["w2"].astype(jnp.float32) + params["b2"][0]
    return x[..., :O]


# ----------------------------------------------------------------------------
# Main
# ----------------------------------------------------------------------------
if __name__ == "__main__":
    # small config: hidden=32, layers=2, prefix_hidden=32, pre_seq_len=8
    batch, pre_seq_len = 2, 8
    hidden_size, prefix_hidden_size, num_hidden_layers = 32, 32, 2

    key = jax.random.PRNGKey(0)
    k_par, _ = jax.random.split(key)

    # prefix token ids, as in usual prefix-tuning usage: arange tiled per batch
    prefix = jnp.tile(jnp.arange(pre_seq_len, dtype=jnp.int32)[None, :],
                      (batch, 1))                                   # (2, 8)

    ok = True
    for prefix_projection in (True, False):
        raw = init_params(
            k_par, pre_seq_len=pre_seq_len, hidden_size=hidden_size,
            prefix_hidden_size=prefix_hidden_size,
            num_hidden_layers=num_hidden_layers,
            prefix_projection=prefix_projection)
        params = prepare_params(raw, prefix_projection=prefix_projection)

        out = prefix_encoder_forward(prefix, params,
                                     prefix_projection=prefix_projection)
        out = jax.block_until_ready(out)
        ref = reference_forward(prefix, params,
                                prefix_projection=prefix_projection)

        expected_shape = (batch, pre_seq_len,
                          num_hidden_layers * 2 * hidden_size)
        ok &= out.shape == expected_shape
        ok &= bool(jnp.allclose(out.astype(jnp.float32), ref,
                                rtol=2e-2, atol=2e-2))

    if ok:
        print("KERNEL_OK")
    else:
        print("KERNEL_MISMATCH")
</pallas_src>

<mosaic_0001>
module attributes {stable_mosaic.version = 11 : i64} {
  func.func @_mlp_kernel(%arg0: i32, %arg1: i32, %arg2: i32, %arg3: memref<16x32xbf16, #tpu.memory_space<vmem>>, %arg4: memref<32x32xbf16, #tpu.memory_space<vmem>>, %arg5: memref<1x32xf32, #tpu.memory_space<vmem>>, %arg6: memref<32x128xbf16, #tpu.memory_space<vmem>>, %arg7: memref<1x128xf32, #tpu.memory_space<vmem>>, %arg8: memref<16x128xf32, #tpu.memory_space<vmem>>, %arg9: memref<16x32xbf16, #tpu.memory_space<vmem>>) attributes {dimension_semantics = [#tpu.dimension_semantics<parallel>, #tpu.dimension_semantics<parallel>, #tpu.dimension_semantics<arbitrary>], iteration_bounds = array<i64: 1, 1, 1>, scalar_prefetch = 0 : i64, scratch_operands = 1 : i64, tpu.core_type = #tpu.core_type<tc>, window_params = [{transform_indices = @transform_0, window_bounds = array<i64: 16, 32>}, {pipeline_mode = #tpu.pipeline_mode<synchronous>, transform_indices = @transform_1, window_bounds = array<i64: 32, 32>}, {pipeline_mode = #tpu.pipeline_mode<synchronous>, transform_indices = @transform_2, window_bounds = array<i64: 1, 32>}, {transform_indices = @transform_3, window_bounds = array<i64: 32, 128>}, {transform_indices = @transform_4, window_bounds = array<i64: 1, 128>}, {transform_indices = @transform_5, window_bounds = array<i64: 16, 128>}]} {
    %c0_i32 = arith.constant 0 : i32
    %0 = arith.cmpi eq, %arg2, %c0_i32 : i32
    %1 = arith.extui %0 : i1 to i32
    %c0_i32_0 = arith.constant 0 : i32
    %2 = arith.cmpi ne, %1, %c0_i32_0 : i32
    scf.if %2 {
      %c0_8 = arith.constant 0 : index
      %c0_9 = arith.constant 0 : index
      %10 = vector.load %arg3[%c0_8, %c0_9] : memref<16x32xbf16, #tpu.memory_space<vmem>>, vector<16x32xbf16>
      %c0_10 = arith.constant 0 : index
      %c0_11 = arith.constant 0 : index
      %11 = vector.load %arg4[%c0_10, %c0_11] : memref<32x32xbf16, #tpu.memory_space<vmem>>, vector<32x32xbf16>
      %cst_12 = arith.constant dense<0.000000e+00> : vector<16x32xf32>
      %12 = tpu.matmul %10, %11, %cst_12 {dimension_numbers = #tpu.dot_dimension_numbers<[1], [0], [0], [1], [0, 0, 1, 1], [], []>} : vector<16x32xbf16>, vector<32x32xbf16>, vector<16x32xf32> -> vector<16x32xf32>
      %c0_13 = arith.constant 0 : index
      %c0_14 = arith.constant 0 : index
      %13 = vector.load %arg5[%c0_13, %c0_14] : memref<1x32xf32, #tpu.memory_space<vmem>>, vector<1x32xf32>
      %14 = vector.broadcast %13 : vector<1x32xf32> to vector<16x32xf32>
      %15 = arith.addf %12, %14 : vector<16x32xf32>
      %16 = math.tanh %15 : vector<16x32xf32>
      %17 = arith.truncf %16 : vector<16x32xf32> to vector<16x32xbf16>
      %c0_15 = arith.constant 0 : index
      %c0_16 = arith.constant 0 : index
      %18 = vector.load %arg9[%c0_15, %c0_16] : memref<16x32xbf16, #tpu.memory_space<vmem>>, vector<16x32xbf16>
      tpu.vector_store %arg9[%c0_15, %c0_16], %17 {strides = array<i32>} : memref<16x32xbf16, #tpu.memory_space<vmem>>, vector<16x32xbf16>,
    } else {
    }
    %c0 = arith.constant 0 : index
    %c0_1 = arith.constant 0 : index
    %3 = vector.load %arg9[%c0, %c0_1] : memref<16x32xbf16, #tpu.memory_space<vmem>>, vector<16x32xbf16>
    %c0_2 = arith.constant 0 : index
    %c0_3 = arith.constant 0 : index
    %4 = vector.load %arg6[%c0_2, %c0_3] : memref<32x128xbf16, #tpu.memory_space<vmem>>, vector<32x128xbf16>
    %cst = arith.constant dense<0.000000e+00> : vector<16x128xf32>
    %5 = tpu.matmul %3, %4, %cst {dimension_numbers = #tpu.dot_dimension_numbers<[1], [0], [0], [1], [0, 0, 1, 1], [], []>} : vector<16x32xbf16>, vector<32x128xbf16>, vector<16x128xf32> -> vector<16x128xf32>
    %c0_4 = arith.constant 0 : index
    %c0_5 = arith.constant 0 : index
    %6 = vector.load %arg7[%c0_4, %c0_5] : memref<1x128xf32, #tpu.memory_space<vmem>>, vector<1x128xf32>
    %7 = vector.broadcast %6 : vector<1x128xf32> to vector<16x128xf32>
    %8 = arith.addf %5, %7 : vector<16x128xf32>
    %c0_6 = arith.constant 0 : index
    %c0_7 = arith.constant 0 : index
    %9 = vector.load %arg8[%c0_6, %c0_7] : memref<16x128xf32, #tpu.memory_space<vmem>>, vector<16x128xf32>
    tpu.vector_store %arg8[%c0_6, %c0_7], %8 {strides = array<i32>} : memref<16x128xf32, #tpu.memory_space<vmem>>, vector<16x128xf32>,
    return
  }
  func.func @transform_0(%arg0: i32, %arg1: i32, %arg2: i32) -> (i32, i32) {
    %c0_i32 = arith.constant 0 : i32
    %c0_i32_0 = arith.constant 0 : i32
    return %arg1, %c0_i32 : i32, i32
  }
  func.func @transform_1(%arg0: i32, %arg1: i32, %arg2: i32) -> (i32, i32) {
    %c0_i32 = arith.constant 0 : i32
    %c0_i32_0 = arith.constant 0 : i32
    %c0_i32_1 = arith.constant 0 : i32
    return %c0_i32, %c0_i32_0 : i32, i32
  }
  func.func @transform_2(%arg0: i32, %arg1: i32, %arg2: i32) -> (i32, i32) {
    %c0_i32 = arith.constant 0 : i32
    %c0_i32_0 = arith.constant 0 : i32
    %c0_i32_1 = arith.constant 0 : i32
    return %c0_i32, %c0_i32_0 : i32, i32
  }
  func.func @transform_3(%arg0: i32, %arg1: i32, %arg2: i32) -> (i32, i32) {
    %c1_i32 = arith.constant 1 : i32
    %0 = arith.muli %arg0, %c1_i32 : i32
    %1 = arith.addi %0, %arg2 : i32
    %c0_i32 = arith.constant 0 : i32
    %c0_i32_0 = arith.constant 0 : i32
    return %c0_i32, %1 : i32, i32
  }
  func.func @transform_4(%arg0: i32, %arg1: i32, %arg2: i32) -> (i32, i32) {
    %c1_i32 = arith.constant 1 : i32
    %0 = arith.muli %arg0, %c1_i32 : i32
    %1 = arith.addi %0, %arg2 : i32
    %c0_i32 = arith.constant 0 : i32
    %c0_i32_0 = arith.constant 0 : i32
    return %c0_i32, %1 : i32, i32
  }
  func.func @transform_5(%arg0: i32, %arg1: i32, %arg2: i32) -> (i32, i32) {
    %c1_i32 = arith.constant 1 : i32
    %0 = arith.muli %arg0, %c1_i32 : i32
    %1 = arith.addi %0, %arg2 : i32
    %c0_i32 = arith.constant 0 : i32
    return %arg1, %1 : i32, i32
  }
}

</mosaic_0001>

<llo_original>
// kernel: tpu_custom_call.1
$region0: #{tpu_custom_call.1}
  #allocation0 [shape = 'u32[]', space=smem, size = 0x4, offset = 0x4, fixed_abs, tag = 'smem constant byte address 0x4 - core index']
  #allocation1 [shape = 'u32[144,128]{1,0:T(1,128)}', space=vmem, size = 0x12000, scoped, tag = 'internal scratch']
  #allocation2 [shape = 'bf16[16,32]{1,0:T(8,128)(2,1)}', space=vmem, size = 0x1000, scoped, tag = 'scratch operand']
  %s0 = inlined_call_operand.hbm [shape: bf16[16,32], index: 0, kind: input, shape index: {}]
  %s1 = inlined_call_operand.hbm [shape: bf16[32,32], index: 1, kind: input, shape index: {}]
  %s2 = inlined_call_operand.vmem [shape: f32[1,32], index: 2, kind: input, shape index: {}]
  %s3 = inlined_call_operand.hbm [shape: bf16[32,128], index: 3, kind: input, shape index: {}]
  %s4 = inlined_call_operand.vmem [shape: f32[1,128], index: 4, kind: input, shape index: {}]
  %s5 = inlined_call_operand.hbm [shape: f32[16,128], index: 5, kind: output, shape index: {}]
  %s6 = sld [smem:[#allocation0]]
  $region46: #{tpu_custom_call.1} parent=0
    _
  %s8 = ssub.s32 1, %s6
  %s9 = scalar_select 0, %s8, %s6
  $region1: #{tpu_custom_call.1} parent=0
    #allocation3 [shape = 'u8[4096]{0}', space=vmem, size = 0x1000, scoped, tag = 'input window, operand 0, single buffered']
    #allocation4 [shape = 's32[1]{0}', space=sflag, size = 0x4, scoped, tag = 'scoped memory for tpu_custom_call.1']
    #allocation5 [shape = 's32[1]{0}', space=sflag, size = 0x4, scoped, tag = 'scoped memory for tpu_custom_call.1']
    #allocation6 [shape = 'u8[8192]{0}', space=vmem, size = 0x2000, scoped, tag = 'input window, operand 1, single buffered']
    #allocation7 [shape = 's32[1]{0}', space=sflag, size = 0x4, scoped, tag = 'scoped memory for tpu_custom_call.1']
    #allocation8 [shape = 'u8[8192]{0}', space=vmem, size = 0x2000, scoped, tag = 'input window, operand 3, single buffered']
    #allocation9 [shape = 'u8[8192]{0}', space=vmem, size = 0x2000, scoped, tag = 'output window, operand 0, single buffered']
    %10 = vsyncpa [#allocation4], 0
    %11 = vsyncpa [#allocation7], 0
    %12 = vsyncpa [#allocation5], 0
    // Predicated region
    $region2: #{tpu_custom_call.1} parent=1 // pred_check
      _
    $region3: #{tpu_custom_call.1} parent=1 // pred_check_branch
      %14 = sbr.rel (0) target = $region5
    $region4: #{tpu_custom_call.1} parent=1 // pred_region
      %s16 = ssub.s32 128, 128
      %17 = vsyncadd [#allocation4], %s16
      %s18 = sshll.u32 [#allocation3], 4
      %s19 = int_to_ptr.vmem [resolvable:$true] %s18
      %24 = dma.hbm_to_vmem [thread:$0]  %s0, 128, %s19, [#allocation4], 64, 64, 4
    $region5: #{tpu_custom_call.1} parent=1 // pred_fallthru
      _
    // Predicated region
    $region6: #{tpu_custom_call.1} parent=1 // pred_check
      _
    $region7: #{tpu_custom_call.1} parent=1 // pred_check_branch
      %26 = sbr.rel (0) target = $region9
    $region8: #{tpu_custom_call.1} parent=1 // pred_region
      %s28 = ssub.s32 256, 256
      %29 = vsyncadd [#allocation7], %s28
      %s30 = sshll.u32 [#allocation6], 4
      %s31 = int_to_ptr.vmem [resolvable:$true] %s30
      %36 = dma.hbm_to_vmem [thread:$0]  %s1, 256, %s31, [#allocation7], 64, 64, 4
    $region9: #{tpu_custom_call.1} parent=1 // pred_fallthru
      _
    // Predicated region
    $region10: #{tpu_custom_call.1} parent=1 // pred_check
      _
    $region11: #{tpu_custom_call.1} parent=1 // pred_check_branch
      %38 = sbr.rel (0) target = $region13
    $region12: #{tpu_custom_call.1} parent=1 // pred_region
      _
    $region13: #{tpu_custom_call.1} parent=1 // pred_fallthru
      _
    // Predicated region
    $region14: #{tpu_custom_call.1} parent=1 // pred_check
      _
    $region15: #{tpu_custom_call.1} parent=1 // pred_check_branch
      %40 = sbr.rel (0) target = $region17
    $region16: #{tpu_custom_call.1} parent=1 // pred_region
      %s41 = sadd.s32 0, 0
      %s43 = ssub.s32 256, 256
      %44 = vsyncadd [#allocation7], %s43
      %s45 = smul.addr %s41, 64
      %s46 = scalar_lea.hbm %s3, %s45
      %s47 = sshll.u32 [#allocation8], 4
      %s48 = int_to_ptr.vmem [resolvable:$true] %s47
      %53 = dma.hbm_to_vmem [thread:$0]  %s46, 256, %s48, [#allocation7], 64, 64, 4
    $region17: #{tpu_custom_call.1} parent=1 // pred_fallthru
      _
    // Predicated region
    $region18: #{tpu_custom_call.1} parent=1 // pred_check
      _
    $region19: #{tpu_custom_call.1} parent=1 // pred_check_branch
      %55 = sbr.rel (0) target = $region21
    $region20: #{tpu_custom_call.1} parent=1 // pred_region
      %s56 = sadd.s32 0, 0
      %p57 = scmp.lt.s32.totalorder %s56, 0
      %s58 = scalar_select %p57, %s56, 0
      %s59 = scalar_lea.vmem %s4, %s58
      %s60 = sadd.s32 0, 0
    $region21: #{tpu_custom_call.1} parent=1 // pred_fallthru
      _
    // Predicated region
    $region22: #{tpu_custom_call.1} parent=1 // pred_check
      _
    $region23: #{tpu_custom_call.1} parent=1 // pred_check_branch
      %62 = sbr.rel (0) target = $region25
    $region24: #{tpu_custom_call.1} parent=1 // pred_region
      %63 = dma.done [#allocation4], 128
    $region25: #{tpu_custom_call.1} parent=1 // pred_fallthru
      _
    // Predicated region
    $region26: #{tpu_custom_call.1} parent=1 // pred_check
      _
    $region27: #{tpu_custom_call.1} parent=1 // pred_check_branch
      %65 = sbr.rel (0) target = $region29
    $region28: #{tpu_custom_call.1} parent=1 // pred_region
      %66 = dma.done [#allocation7], 256
    $region29: #{tpu_custom_call.1} parent=1 // pred_fallthru
      _
    // Predicated region
    $region30: #{tpu_custom_call.1} parent=1 // pred_check
      _
    $region31: #{tpu_custom_call.1} parent=1 // pred_check_branch
      %68 = sbr.rel (0) target = $region33
    $region32: #{tpu_custom_call.1} parent=1 // pred_region
      %69 = dma.done [#allocation7], 256
    $region33: #{tpu_custom_call.1} parent=1 // pred_fallthru
      _
    %s70 = sadd.s32 0, 0
    %p71 = scmp.lt.s32.totalorder %s70, 0
    %s72 = scalar_select %p71, %s70, 0
    %s73 = scalar_lea.vmem %s4, %s72
    %s74 = sadd.s32 0, 0
    %s75 = sadd.s32 0, 0
    %p76 = scmp.lt.s32.totalorder %s75, 0
    %s77 = scalar_select %p76, %s75, 0
    %s78 = scalar_lea.vmem %s4, %s77
    %s79 = sadd.s32 0, 0
    %s80 = sadd.s32 0, 0
    %p82 = scmp.eq.s32.totalorder 0, 0
    // Predicated region
    $region34: #{tpu_custom_call.1} parent=1 // pred_check
      %p83 = pneg %p82
    $region35: #{tpu_custom_call.1} parent=1 // pred_check_branch
      %85 = sbr.rel (%p83) target = $region37
    $region36: #{tpu_custom_call.1} parent=1 // pred_region
      %v86 = vld [vmem:[#allocation3] sm:$0xf]
      %v87 = vld [vmem:[#allocation3 + $0x4] sm:$0xf]
      %v88 = vld [vmem:[#allocation6] sm:$0xf]
      %v89 = vld [vmem:[#allocation6 + $0x4] sm:$0xf]
      %v90 = vld [vmem:[#allocation6 + $0x8] sm:$0xf]
      %v91 = vld [vmem:[#allocation6 + $0xc] sm:$0xf]
      %v92 = vld [vmem:[%s2] sm:$0x1]
      %v94 = vlaneseq
      %v95 = vshrl.u32 %v94, 7
      %v96 = vsub.s32 0, %v95
      %v97 = vrot.slane %v92, %v96
      %v101 = vunpack.c.l.b16 %v86
      %v102 = vunpack.c.l.b16 %v87
      %v103 = vpack.c.b16 %v102, %v101
      %v108 = vunpack.c.l.b16 %v88
      %v109 = vunpack.c.l.b16 %v89
      %v110 = vunpack.c.l.b16 %v90
      %v111 = vunpack.c.l.b16 %v91
      %v112 = vpack.c.b16 %v109, %v108
      %v113 = vpack.c.b16 %v111, %v110
      %vm116 = vcmask 261120
      %v118 = vsel %vm116, %v103, 0
      %120 = vmatprep.subr.bf16.mxu0 0
      %121 = vmatpush1.bf16.msra.mxu0 0
      %122 = vmatprep.subr.bf16.mxu0 0
      %123 = vmatpush1.bf16.msra.mxu0 0
      %124 = vmatprep.subr.bf16.mxu0 0
      %125 = vmatpush1.bf16.msra.mxu0 0
      %126 = vmatprep.subr.bf16.mxu0 0
      %127 = vmatpush1.bf16.msra.mxu0 0
      %128 = vmatprep.subr.bf16.mxu0 0
      %129 = vmatpush1.bf16.msra.mxu0 0
      %130 = vmatprep.subr.bf16.mxu0 0
      %131 = vmatpush1.bf16.msra.mxu0 0
      %132 = vmatprep.subr.bf16.mxu0 0
      %133 = vmatpush1.bf16.msra.mxu0 %v113
      %134 = vmatprep.subr.bf16.mxu0 0
      %135 = vmatpush1.bf16.msra.mxu0 %v112
      %136 = vmatprep.subr.bf16.mxu0 0
      %137 = vmatpush2.bf16.msra.mxu0 0
      %138 = vmatprep.subr.bf16.mxu0 0
      %139 = vmatpush2.bf16.msra.mxu0 0
      %140 = vmatprep.subr.bf16.mxu0 0
      %141 = vmatpush2.bf16.msra.mxu0 0
      %142 = vmatprep.subr.bf16.mxu0 0
      %143 = vmatpush2.bf16.msra.mxu0 0
      %144 = vmatprep.subr.bf16.mxu0 0
      %145 = vmatpush2.bf16.msra.mxu0 0
      %146 = vmatprep.subr.bf16.mxu0 0
      %147 = vmatpush2.bf16.msra.mxu0 0
      %148 = vmatprep.subr.bf16.mxu0 0
      %149 = vmatpush2.bf16.msra.mxu0 0
      %150 = vmatprep.subr.bf16.mxu0 0
      %151 = vmatpush2.bf16.msra.mxu0 0
      %152 = vmatprep.mubr.bf16.mxu0 0
      %153 = vmatmul.mubr.bf16.gmra.mxu0 %v118
      %v154 = vpop.f32.mrf.mxu0
      %v155 = vadd.f32 %v97, %v154
      %v156 = vpop.f32.mrf.mxu0
      %v157 = vpop.f32.mrf.mxu0
      %v158 = vadd.f32 %v97, %v157
      %v159 = vpop.f32.mrf.mxu0
      %160 = vdwg.mxu0
      %v161 = vtanh.pop %v155
      %v162 = vtanh.pop %v158
      %v163 = vpack.c.bf16 %v162, %v161
      %v165 = vunpack.c.l.b16 %v163
      %v166 = vunpack.c.h.b16 %v163
      %v167 = vpack.c.b16 %v165, %v165
      %v168 = vpack.c.b16 %v166, %v166
      %vm171 = vcmask 257024
      %172 = vst.msk [vmem:[#allocation2] sm:$0xf] %vm171, %v167
      %173 = vst.msk [vmem:[#allocation2 + $0x4] sm:$0xf] %vm171, %v168
    $region37: #{tpu_custom_call.1} parent=1 // pred_fallthru
      _
    %v174 = vld [vmem:[#allocation2] sm:$0xf]
    %v175 = vld [vmem:[#allocation2 + $0x4] sm:$0xf]
    %v176 = vld [vmem:[#allocation8] sm:$0xf]
    %v177 = vld [vmem:[#allocation8 + $0x4] sm:$0xf]
    %v178 = vld [vmem:[#allocation8 + $0x8] sm:$0xf]
    %v179 = vld [vmem:[#allocation8 + $0xc] sm:$0xf]
    %v180 = vld [vmem:[%s78] sm:$0x1]
    %v182 = vlaneseq
    %v183 = vshrl.u32 %v182, 7
    %v184 = vsub.s32 0, %v183
    %v185 = vrot.slane %v180, %v184
    %v189 = vunpack.c.l.b16 %v174
    %v190 = vunpack.c.l.b16 %v175
    %v191 = vpack.c.b16 %v190, %v189
    %v196 = vunpack.c.l.b16 %v176
    %v197 = vunpack.c.l.b16 %v177
    %v198 = vunpack.c.l.b16 %v178
    %v199 = vunpack.c.l.b16 %v179
    %v200 = vpack.c.b16 %v197, %v196
    %v201 = vpack.c.b16 %v199, %v198
    %vm204 = vcmask 261120
    %v206 = vsel %vm204, %v191, 0
    %208 = vmatprep.subr.bf16.mxu0 0
    %209 = vmatpush1.bf16.msra.mxu0 0
    %210 = vmatprep.subr.bf16.mxu0 0
    %211 = vmatpush1.bf16.msra.mxu0 0
    %212 = vmatprep.subr.bf16.mxu0 0
    %213 = vmatpush1.bf16.msra.mxu0 0
    %214 = vmatprep.subr.bf16.mxu0 0
    %215 = vmatpush1.bf16.msra.mxu0 0
    %216 = vmatprep.subr.bf16.mxu0 0
    %217 = vmatpush1.bf16.msra.mxu0 0
    %218 = vmatprep.subr.bf16.mxu0 0
    %219 = vmatpush1.bf16.msra.mxu0 0
    %220 = vmatprep.subr.bf16.mxu0 0
    %221 = vmatpush1.bf16.msra.mxu0 %v201
    %222 = vmatprep.subr.bf16.mxu0 0
    %223 = vmatpush1.bf16.msra.mxu0 %v200
    %224 = vmatprep.subr.bf16.mxu0 0
    %225 = vmatpush2.bf16.msra.mxu0 0
    %226 = vmatprep.subr.bf16.mxu0 0
    %227 = vmatpush2.bf16.msra.mxu0 0
    %228 = vmatprep.subr.bf16.mxu0 0
    %229 = vmatpush2.bf16.msra.mxu0 0
    %230 = vmatprep.subr.bf16.mxu0 0
    %231 = vmatpush2.bf16.msra.mxu0 0
    %232 = vmatprep.subr.bf16.mxu0 0
    %233 = vmatpush2.bf16.msra.mxu0 0
    %234 = vmatprep.subr.bf16.mxu0 0
    %235 = vmatpush2.bf16.msra.mxu0 0
    %236 = vmatprep.subr.bf16.mxu0 0
    %237 = vmatpush2.bf16.msra.mxu0 0
    %238 = vmatprep.subr.bf16.mxu0 0
    %239 = vmatpush2.bf16.msra.mxu0 0
    %240 = vmatprep.mubr.bf16.mxu0 0
    %241 = vmatmul.mubr.bf16.gmra.mxu0 %v206
    %v242 = vpop.f32.mrf.mxu0
    %v243 = vadd.f32 %v185, %v242
    %v244 = vpop.f32.mrf.mxu0
    %v245 = vpop.f32.mrf.mxu0
    %v246 = vadd.f32 %v185, %v245
    %v247 = vpop.f32.mrf.mxu0
    %248 = vdwg.mxu0
    %249 = vst [vmem:[#allocation9] sm:$0xff] %v243
    %250 = vst [vmem:[#allocation9 + $0x8] sm:$0xff] %v246
    // Predicated region
    $region38: #{tpu_custom_call.1} parent=1 // pred_check
      _
    $region39: #{tpu_custom_call.1} parent=1 // pred_check_branch
      %252 = sbr.rel (0) target = $region41
    $region40: #{tpu_custom_call.1} parent=1 // pred_region
      %s253 = sadd.s32 0, 0
      %s255 = ssub.s32 256, 256
      %256 = vsyncadd [#allocation5], %s255
      %s257 = smul.addr %s253, 128
      %s258 = scalar_lea.hbm %s5, %s257
      %s259 = sshll.u32 [#allocation9], 4
      %s260 = int_to_ptr.vmem [resolvable:$true] %s259
      %265 = dma.vmem_to_hbm [thread:$0]  %s260, 256, %s258, [#allocation5], 128, 128, 8
    $region41: #{tpu_custom_call.1} parent=1 // pred_fallthru
      _
    // Predicated region
    $region42: #{tpu_custom_call.1} parent=1 // pred_check
      _
    $region43: #{tpu_custom_call.1} parent=1 // pred_check_branch
      %267 = sbr.rel (0) target = $region45
    $region44: #{tpu_custom_call.1} parent=1 // pred_region
      %268 = dma.done [#allocation5], 256
    $region45: #{tpu_custom_call.1} parent=1 // pred_fallthru
      _
    %269 = vsyncpa [#allocation4], 1
    %270 = vsyncpa [#allocation7], 1
    %271 = vsyncpa [#allocation5], 1

</llo_original>
